<compile_context>
chip_gen: v7x
topology: tpu7x:2x2x1
jax: 0.10.0
libtpu: 0.0.40
codegen_flags: <defaults>
</compile_context>

<pallas_src>
import functools

import jax
import jax.numpy as jnp
from jax import lax
from jax.experimental import pallas as pl
from jax.experimental.pallas import tpu as pltpu


def _round_up(v, m):
    return ((v + m - 1) // m) * m


def _min_fill(dtype):
    if jnp.issubdtype(dtype, jnp.floating):
        return jnp.array(-jnp.inf, dtype=dtype)
    return jnp.array(jnp.iinfo(dtype).min, dtype=dtype)


def _tpu_tiling_params():
    """Return (target input-block bytes, scoped-VMEM ceiling) per generation."""
    kind = ""
    try:
        kind = jax.devices()[0].device_kind.lower()
    except Exception:  # pragma: no cover - conservative fallback
        pass
    if "v7" in kind:
        # 3.2 TB/s HBM (step overhead hurts most) but only 64 MiB physical VMEM.
        return 8 << 20, 48 << 20
    if "v5 lite" in kind or "v5e" in kind or "v5lite" in kind:
        # ~0.82 TB/s HBM: tile-size win saturates around 4-6 MiB blocks.
        return 6 << 20, 96 << 20
    # v6e and default: 128 MiB physical VMEM, ~1.4 TB/s HBM.
    return 8 << 20, 100 << 20


def _plan_tiles(rows, hw, itemsize, target_bytes):
    """Pick (row_tile, hw_tile). hw_tile == hw means 'full spatial extent'."""
    sub = {2: 16, 1: 32}.get(itemsize, 8)          # sublane pack of the dtype
    hw_pad = _round_up(hw, 128)                    # real VMEM footprint width
    row_bytes = hw_pad * itemsize
    tr_budget = (target_bytes // row_bytes) // sub * sub

    if tr_budget >= sub:
        # Common path: full spatial extent on the lane axis, tile rows.
        thw = hw
        if tr_budget >= rows:
            if rows >= 2 * sub:
                # Ensure >=2 grid steps: lets v7x use both TensorCores and
                # keeps the DMA/compute pipeline busy.
                tr = _round_up(pl.cdiv(rows, 2), sub)
            else:
                tr = rows          # single full-extent block (legal)
        else:
            tr = tr_budget
        return tr, thw

    # Huge spatial map: even a minimum row stripe over hw_pad exceeds the
    # budget -> chunk the spatial axis and accumulate across chunks.
    tr = sub if rows >= sub else rows
    thw = (target_bytes // (_round_up(tr, sub) * itemsize)) // 128 * 128
    thw = max(128, min(thw, hw_pad))
    if thw >= hw:
        thw = hw
    return tr, thw


def _concat_pool_kernel(x_ref, out_ref, m_sc, s_sc, *, hw, thw, needs_mask):
    """Grid = (row_blocks, hw_blocks); hw axis is the (arbitrary) reduction."""
    j = pl.program_id(1)

    @pl.when(j == 0)
    def _init():
        m_sc[...] = jnp.full_like(m_sc, -jnp.inf)
        s_sc[...] = jnp.zeros_like(s_sc)

    x = x_ref[...]                                   # (TR, THW) block
    if needs_mask:
        # Partial last hw chunk: neutralize padded / out-of-bounds lanes.
        valid = hw - j * thw
        lane = lax.broadcasted_iota(jnp.int32, x.shape, 1)
        keep = lane < valid
        x_max = jnp.where(keep, x, _min_fill(x.dtype))
        x_sum = jnp.where(keep, x, jnp.zeros((), x.dtype))
    else:
        x_max = x
        x_sum = x

    # Widening to f32 is fused into the reductions (no f32 copy of the tile).
    m_sc[...] = jnp.maximum(
        m_sc[...], jnp.max(x_max, axis=-1, keepdims=True).astype(jnp.float32))
    s_sc[...] = s_sc[...] + jnp.sum(
        x_sum, axis=-1, dtype=jnp.float32, keepdims=True)

    @pl.when(j == pl.num_programs(1) - 1)
    def _finalize():
        out_ref[:, 0:1] = m_sc[...].astype(out_ref.dtype)
        out_ref[:, 1:2] = (s_sc[...] / jnp.float32(hw)).astype(out_ref.dtype)


def adaptive_concat_pool2d(x, *, row_tile=None, hw_tile=None):
    """x: (N, C, H, W) -> (N, 2C, 1, 1), matching the PyTorch module."""
    n, c, h, w = x.shape
    rows, hw = n * c, h * w
    x2d = x.reshape(rows, hw)
    itemsize = jnp.dtype(x.dtype).itemsize
    sub = {2: 16, 1: 32}.get(itemsize, 8)

    target_bytes, vmem_cap = _tpu_tiling_params()
    tr, thw = _plan_tiles(rows, hw, itemsize, target_bytes)

    # Optional explicit overrides (mainly for tests / tuning).
    if row_tile is not None:
        tr = rows if row_tile >= rows else _round_up(row_tile, sub)
    if hw_tile is not None:
        t = _round_up(min(hw_tile, hw), 128)
        thw = hw if t >= hw else t

    n_row_blk = pl.cdiv(rows, tr)
    n_hw_blk = pl.cdiv(hw, thw)
    needs_mask = (n_hw_blk > 1) and (hw % thw != 0)

    # Scoped-VMEM budget: double-buffered input block + output block + scratch.
    in_blk = _round_up(tr, sub) * _round_up(thw, 128) * itemsize
    out_blk = _round_up(tr, 8) * 128 * itemsize
    scratch_b = 2 * _round_up(tr, 8) * 128 * 4
    needed = 2 * in_blk + 2 * out_blk + scratch_b + (2 << 20)
    vmem_limit = int(min(vmem_cap, max(needed, 32 << 20)))

    cost = pl.CostEstimate(
        flops=2 * rows * hw,              # max-compare + sum-add per element
        transcendentals=0,
        bytes_accessed=rows * hw * itemsize + rows * 2 * itemsize,
    )

    kernel = functools.partial(
        _concat_pool_kernel, hw=hw, thw=thw, needs_mask=needs_mask)

    out2 = pl.pallas_call(
        kernel,
        out_shape=jax.ShapeDtypeStruct((rows, 2), x.dtype),
        grid_spec=pltpu.PrefetchScalarGridSpec(
            num_scalar_prefetch=0,
            grid=(n_row_blk, n_hw_blk),
            in_specs=[pl.BlockSpec((tr, thw), lambda i, j: (i, j))],
            out_specs=pl.BlockSpec((tr, 2), lambda i, j: (i, 0)),
            scratch_shapes=[pltpu.VMEM((tr, 1), jnp.float32),
                            pltpu.VMEM((tr, 1), jnp.float32)],
        ),
        compiler_params=pltpu.CompilerParams(
            dimension_semantics=("parallel", "arbitrary"),
            vmem_limit_bytes=vmem_limit),
        cost_estimate=cost,
    )(x2d)

    # (rows, 2) -> (N, C, 2) -> (N, 2, C) -> (N, 2C, 1, 1); tiny XLA glue.
    # Column order (max, avg) matches torch.cat([mp(x), ap(x)], dim=1).
    return out2.reshape(n, c, 2).transpose(0, 2, 1).reshape(n, 2 * c, 1, 1)


if __name__ == "__main__":
    key = jax.random.PRNGKey(0)
    k0, k1, k2 = jax.random.split(key, 3)

    def ref(x):
        mp = jnp.max(x, axis=(2, 3), keepdims=True)
        ap = jnp.mean(x, axis=(2, 3), keepdims=True)
        return jnp.concatenate([mp, ap], axis=1)

    # Primary small-shape check (single block path).
    x = jax.random.normal(k0, (2, 4, 16, 16), dtype=jnp.float32)
    out = jax.block_until_ready(adaptive_concat_pool2d(x))
    assert out.shape == (2, 8, 1, 1), out.shape
    assert jnp.allclose(out, ref(x), atol=1e-5, rtol=1e-5)

    # Multi-row-block grid with a partial last row block.
    x2 = jax.random.normal(k1, (2, 100, 16, 16), dtype=jnp.float32)
    out2 = jax.block_until_ready(adaptive_concat_pool2d(x2, row_tile=64))
    assert out2.shape == (2, 200, 1, 1), out2.shape
    assert jnp.allclose(out2, ref(x2), atol=1e-5, rtol=1e-5)

    # hw-chunked accumulation path with a masked partial last chunk
    # (hw = 324, chunks of 128 -> 128/128/68-valid).
    x3 = jax.random.normal(k2, (2, 8, 18, 18), dtype=jnp.float32)
    out3 = jax.block_until_ready(
        adaptive_concat_pool2d(x3, row_tile=8, hw_tile=128))
    assert out3.shape == (2, 16, 1, 1), out3.shape
    assert jnp.allclose(out3, ref(x3), atol=1e-5, rtol=1e-5)

    print("KERNEL_OK")
</pallas_src>

<mosaic_0001>
module attributes {stable_mosaic.version = 11 : i64} {
  func.func @_concat_pool_kernel(%arg0: i32, %arg1: i32, %arg2: memref<8x256xf32, #tpu.memory_space<vmem>>, %arg3: memref<8x2xf32, #tpu.memory_space<vmem>>, %arg4: memref<8x1xf32, #tpu.memory_space<vmem>>, %arg5: memref<8x1xf32, #tpu.memory_space<vmem>>) attributes {dimension_semantics = [#tpu.dimension_semantics<parallel>, #tpu.dimension_semantics<arbitrary>], iteration_bounds = array<i64: 1, 1>, scalar_prefetch = 0 : i64, scratch_operands = 2 : i64, tpu.core_type = #tpu.core_type<tc>, window_params = [{transform_indices = @transform_0, window_bounds = array<i64: 8, 256>}, {transform_indices = @transform_1, window_bounds = array<i64: 8, 2>}]} {
    %c0_i32 = arith.constant 0 : i32
    %0 = arith.cmpi eq, %arg1, %c0_i32 : i32
    %1 = arith.extui %0 : i1 to i32
    %c0_i32_0 = arith.constant 0 : i32
    %2 = arith.cmpi ne, %1, %c0_i32_0 : i32
    scf.if %2 {
      %cst_13 = arith.constant 0xFF800000 : f32
      %17 = vector.broadcast %cst_13 : f32 to vector<8x1xf32>
      %c0_14 = arith.constant 0 : index
      %c0_15 = arith.constant 0 : index
      %18 = vector.load %arg4[%c0_14, %c0_15] : memref<8x1xf32, #tpu.memory_space<vmem>>, vector<8x1xf32>
      tpu.vector_store %arg4[%c0_14, %c0_15], %17 {strides = array<i32>} : memref<8x1xf32, #tpu.memory_space<vmem>>, vector<8x1xf32>,
      %cst_16 = arith.constant 0.000000e+00 : f32
      %19 = vector.broadcast %cst_16 : f32 to vector<8x1xf32>
      %c0_17 = arith.constant 0 : index
      %c0_18 = arith.constant 0 : index
      %20 = vector.load %arg5[%c0_17, %c0_18] : memref<8x1xf32, #tpu.memory_space<vmem>>, vector<8x1xf32>
      tpu.vector_store %arg5[%c0_17, %c0_18], %19 {strides = array<i32>} : memref<8x1xf32, #tpu.memory_space<vmem>>, vector<8x1xf32>,
    } else {
    }
    %c0 = arith.constant 0 : index
    %c0_1 = arith.constant 0 : index
    %3 = vector.load %arg2[%c0, %c0_1] : memref<8x256xf32, #tpu.memory_space<vmem>>, vector<8x256xf32>
    %c0_2 = arith.constant 0 : index
    %c0_3 = arith.constant 0 : index
    %4 = vector.load %arg4[%c0_2, %c0_3] : memref<8x1xf32, #tpu.memory_space<vmem>>, vector<8x1xf32>
    %cst = arith.constant dense<0xFF800000> : vector<8xf32>
    %5 = vector.multi_reduction <maximumf>, %3, %cst [1] : vector<8x256xf32> to vector<8xf32>
    %6 = vector.shape_cast %5 : vector<8xf32> to vector<8x1xf32>
    %7 = arith.maximumf %4, %6 : vector<8x1xf32>
    %c0_4 = arith.constant 0 : index
    %c0_5 = arith.constant 0 : index
    %8 = vector.load %arg4[%c0_4, %c0_5] : memref<8x1xf32, #tpu.memory_space<vmem>>, vector<8x1xf32>
    tpu.vector_store %arg4[%c0_4, %c0_5], %7 {strides = array<i32>} : memref<8x1xf32, #tpu.memory_space<vmem>>, vector<8x1xf32>,
    %c0_6 = arith.constant 0 : index
    %c0_7 = arith.constant 0 : index
    %9 = vector.load %arg5[%c0_6, %c0_7] : memref<8x1xf32, #tpu.memory_space<vmem>>, vector<8x1xf32>
    %cst_8 = arith.constant dense<0.000000e+00> : vector<8xf32>
    %10 = vector.multi_reduction <add>, %3, %cst_8 [1] : vector<8x256xf32> to vector<8xf32>
    %11 = vector.shape_cast %10 : vector<8xf32> to vector<8x1xf32>
    %12 = arith.addf %9, %11 : vector<8x1xf32>
    %c0_9 = arith.constant 0 : index
    %c0_10 = arith.constant 0 : index
    %13 = vector.load %arg5[%c0_9, %c0_10] : memref<8x1xf32, #tpu.memory_space<vmem>>, vector<8x1xf32>
    tpu.vector_store %arg5[%c0_9, %c0_10], %12 {strides = array<i32>} : memref<8x1xf32, #tpu.memory_space<vmem>>, vector<8x1xf32>,
    %c0_i32_11 = arith.constant 0 : i32
    %14 = arith.cmpi eq, %arg1, %c0_i32_11 : i32
    %15 = arith.extui %14 : i1 to i32
    %c0_i32_12 = arith.constant 0 : i32
    %16 = arith.cmpi ne, %15, %c0_i32_12 : i32
    scf.if %16 {
      %c0_13 = arith.constant 0 : index
      %c0_14 = arith.constant 0 : index
      %17 = vector.load %arg4[%c0_13, %c0_14] : memref<8x1xf32, #tpu.memory_space<vmem>>, vector<8x1xf32>
      %c0_15 = arith.constant 0 : index
      %c0_16 = arith.constant 0 : index
      %18 = vector.load %arg3[%c0_15, %c0_16] : memref<8x2xf32, #tpu.memory_space<vmem>>, vector<8x1xf32>
      tpu.vector_store %arg3[%c0_15, %c0_16], %17 {strides = array<i32>} : memref<8x2xf32, #tpu.memory_space<vmem>>, vector<8x1xf32>,
      %c0_17 = arith.constant 0 : index
      %c0_18 = arith.constant 0 : index
      %19 = vector.load %arg5[%c0_17, %c0_18] : memref<8x1xf32, #tpu.memory_space<vmem>>, vector<8x1xf32>
      %cst_19 = arith.constant 2.560000e+02 : f32
      %20 = vector.broadcast %cst_19 : f32 to vector<8x1xf32>
      %21 = arith.divf %19, %20 : vector<8x1xf32>
      %c0_20 = arith.constant 0 : index
      %c1 = arith.constant 1 : index
      %22 = vector.load %arg3[%c0_20, %c1] : memref<8x2xf32, #tpu.memory_space<vmem>>, vector<8x1xf32>
      tpu.vector_store %arg3[%c0_20, %c1], %21 {strides = array<i32>} : memref<8x2xf32, #tpu.memory_space<vmem>>, vector<8x1xf32>,
    } else {
    }
    return
  }
  func.func @transform_0(%arg0: i32, %arg1: i32) -> (i32, i32) {
    %c0_i32 = arith.constant 0 : i32
    return %arg0, %arg1 : i32, i32
  }
  func.func @transform_1(%arg0: i32, %arg1: i32) -> (i32, i32) {
    %c0_i32 = arith.constant 0 : i32
    %c0_i32_0 = arith.constant 0 : i32
    return %arg0, %c0_i32 : i32, i32
  }
}

</mosaic_0001>

<llo_original>
// kernel: tpu_custom_call.1
$region0: #{tpu_custom_call.1}
  #allocation0 [shape = 'u32[]', space=smem, size = 0x4, offset = 0x4, fixed_abs, tag = 'smem constant byte address 0x4 - core index']
  #allocation1 [shape = 'u32[144,128]{1,0:T(1,128)}', space=vmem, size = 0x12000, scoped, tag = 'internal scratch']
  #allocation2 [shape = 'f32[8,1]{1,0:T(8,128)}', space=vmem, size = 0x1000, scoped, tag = 'scratch operand']
  #allocation3 [shape = 'f32[8,1]{1,0:T(8,128)}', space=vmem, size = 0x1000, scoped, tag = 'scratch operand']
  %s0 = inlined_call_operand.hbm [shape: f32[8,256], index: 0, kind: input, shape index: {}]
  %s1 = inlined_call_operand.vmem [shape: f32[8,2], index: 1, kind: output, shape index: {}]
  %s2 = sld [smem:[#allocation0]]
  $region26: #{tpu_custom_call.1} parent=0
    _
  %s4 = ssub.s32 1, %s2
  %s5 = scalar_select 0, %s4, %s2
  $region1: #{tpu_custom_call.1} parent=0
    #allocation4 [shape = 'u8[8192]{0}', space=vmem, size = 0x2000, scoped, tag = 'input window, operand 0, single buffered']
    #allocation5 [shape = 's32[1]{0}', space=sflag, size = 0x4, scoped, tag = 'scoped memory for tpu_custom_call.1']
    %6 = vsyncpa [#allocation5], 0
    // Predicated region
    $region2: #{tpu_custom_call.1} parent=1 // pred_check
      _
    $region3: #{tpu_custom_call.1} parent=1 // pred_check_branch
      %8 = sbr.rel (0) target = $region5
    $region4: #{tpu_custom_call.1} parent=1 // pred_region
      %s10 = ssub.s32 256, 256
      %11 = vsyncadd [#allocation5], %s10
      %s13 = sshll.u32 [#allocation4], 4
      %s14 = int_to_ptr.vmem [resolvable:$true] %s13
      %16 = dma.hbm_to_vmem [thread:$0]  %s0, 256, %s14, [#allocation5]
    $region5: #{tpu_custom_call.1} parent=1 // pred_fallthru
      _
    // Predicated region
    $region6: #{tpu_custom_call.1} parent=1 // pred_check
      _
    $region7: #{tpu_custom_call.1} parent=1 // pred_check_branch
      %18 = sbr.rel (0) target = $region9
    $region8: #{tpu_custom_call.1} parent=1 // pred_region
      %19 = dma.done [#allocation5], 256
    $region9: #{tpu_custom_call.1} parent=1 // pred_fallthru
      _
    %p20 = scmp.eq.s32.totalorder 0, 0
    // Predicated region
    $region10: #{tpu_custom_call.1} parent=1 // pred_check
      %p21 = pneg %p20
    $region11: #{tpu_custom_call.1} parent=1 // pred_check_branch
      %23 = sbr.rel (%p21) target = $region13
    $region12: #{tpu_custom_call.1} parent=1 // pred_region
      %vm24 = vcmask 7168
      %25 = vst.msk [vmem:[#allocation2] sm:$0xff] %vm24, -inf
      %26 = vst.msk [vmem:[#allocation3] sm:$0xff] %vm24, 0.0
    $region13: #{tpu_custom_call.1} parent=1 // pred_fallthru
      _
    %v27 = vld [vmem:[#allocation4] sm:$0xff]
    %v28 = vld [vmem:[#allocation4 + $0x8] sm:$0xff]
    %v29 = vld [vmem:[#allocation2] sm:$0xff]
    %v30 = vmax.f32 %v27, %v28
    %31 = vmax.xlane.f32.xlu0 %v30
    %v32 = vpop.xlane.xlu0 %31
    %v33 = vmax.f32 %v29, %v32
    %vm34 = vcmask 7168
    %35 = vst.msk [vmem:[#allocation2] sm:$0xff] %vm34, %v33
    %v36 = vld [vmem:[#allocation3] sm:$0xff]
    %v37 = vadd.f32 %v27, %v28
    %38 = vadd.xlane.f32.xlu0 %v37
    %v39 = vpop.xlane.xlu0 %38
    %v40 = vadd.f32 %v36, %v39
    %41 = vst.msk [vmem:[#allocation3] sm:$0xff] %vm34, %v40
    // Predicated region
    $region14: #{tpu_custom_call.1} parent=1 // pred_check
      %p42 = pneg %p20
    $region15: #{tpu_custom_call.1} parent=1 // pred_check_branch
      %44 = sbr.rel (%p42) target = $region17
    $region16: #{tpu_custom_call.1} parent=1 // pred_region
      %v45 = vld [vmem:[#allocation2] sm:$0xff]
      %46 = vst.msk [vmem:[%s1] sm:$0xff] %vm34, %v45
      %v47 = vld [vmem:[#allocation3] sm:$0xff]
      %v48 = vrcp.pop 256.0
      %v49 = vmul.f32 %v47, %v48
      %51 = vrot.lane.b32.xlu0 %v49, 1
      %v52 = vpop.permute.xlu0 %51
      %vm54 = vcmask 15368
      %55 = vst.msk [vmem:[%s1] sm:$0xff] %vm54, %v52
    $region17: #{tpu_custom_call.1} parent=1 // pred_fallthru
      _
    // Predicated region
    $region18: #{tpu_custom_call.1} parent=1 // pred_check
      _
    $region19: #{tpu_custom_call.1} parent=1 // pred_check_branch
      %57 = sbr.rel (0) target = $region21
    $region20: #{tpu_custom_call.1} parent=1 // pred_region
      _
    $region21: #{tpu_custom_call.1} parent=1 // pred_fallthru
      _
    // Predicated region
    $region22: #{tpu_custom_call.1} parent=1 // pred_check
      _
    $region23: #{tpu_custom_call.1} parent=1 // pred_check_branch
      %59 = sbr.rel (0) target = $region25
    $region24: #{tpu_custom_call.1} parent=1 // pred_region
      _
    $region25: #{tpu_custom_call.1} parent=1 // pred_fallthru
      _
    %60 = vsyncpa [#allocation5], 1

</llo_original>
